<compile_context>
chip_gen: v7x
topology: tpu7x:2x2x1
jax: 0.10.0
libtpu: 0.0.40
codegen_flags: <defaults>
</compile_context>

<pallas_src>
import functools

import jax
import jax.numpy as jnp
from jax import lax
from jax.experimental import pallas as pl
from jax.experimental.pallas import tpu as pltpu


def _silu(x):
    return x * jax.nn.sigmoid(x)


def _round_up(x, m):
    return ((x + m - 1) // m) * m


# -----------------------------------------------------------------------------
# Kernel: one atom tile per grid step, per-molecule accumulation in the output.
# -----------------------------------------------------------------------------
def torchmd_net_kernel(z_ref, seg_ref, t1_ref, b1_ref, w2o1_ref, b2o1_ref,
                       wo2_ref, hb_ref, out_ref, *, chunk):
    @pl.when(pl.program_id(1) == 0)
    def _init():
        out_ref[...] = jnp.zeros_like(out_ref)

    cdt = t1_ref.dtype
    tile_n = z_ref.shape[0]
    numz_pad = t1_ref.shape[0]
    b_pad = out_ref.shape[-1]

    # ---- fused embedding gather + first linear: onehot(z) @ (embedding @ W1) ----
    z_col = z_ref[...]                                              # (tile_n, 1) i32
    zi = lax.broadcasted_iota(jnp.int32, (tile_n, numz_pad), 1)
    onehot = jnp.where(zi == z_col, 1.0, 0.0).astype(cdt)           # (tile_n, numz_pad)
    t = jnp.dot(onehot, t1_ref[...], preferred_element_type=jnp.float32)
    t = _silu(t + b1_ref[...])                                      # (tile_n, hp) f32

    # ---- folded representation-2nd-linear + head-1st-linear: t @ (W2 @ Wo1) ----
    u = jnp.dot(t.astype(cdt), w2o1_ref[...], preferred_element_type=jnp.float32)
    u = _silu(u + b2o1_ref[...])                                    # (tile_n, h2p) f32

    # ---- head (H/2 -> 1) projection: VPU multiply + lane (XLU) reduce.
    # std is folded into wo2; std*bo2 is a scalar read from SMEM.
    e = jnp.sum(u * wo2_ref[...], axis=-1, keepdims=True) + hb_ref[0, 0]  # (tile_n, 1)

    # ---- scatter(x, batch, reduce='add'): chunked mask + sublane reduce ----
    seg = seg_ref[...]                                              # (tile_n, 1) i32
    n_chunks = max(1, tile_n // chunk)
    mol = lax.broadcasted_iota(jnp.int32, (chunk, b_pad), 1)
    acc = jnp.zeros((1, b_pad), jnp.float32)
    for c in range(n_chunks):          # static chunks -> bounded live vregs per chunk
        sl = slice(c * chunk, (c + 1) * chunk)
        contrib = jnp.where(mol == seg[sl], e[sl], 0.0)             # (chunk, b_pad)
        acc = acc + jnp.sum(contrib, axis=0, keepdims=True)
    out_ref[...] += acc[None]                                       # (1, 1, b_pad)


# -----------------------------------------------------------------------------
# Parameter preparation: fold embedding@W1, W2@Wo1, std; lane-pad to 128.
# -----------------------------------------------------------------------------
def prepare_params(params, compute_dtype=jnp.float32):
    f32 = jnp.float32
    H = params["W1"].shape[0]
    H2 = params["Wo1"].shape[1]
    num_z = params["embedding"].shape[0]
    hp = _round_up(H, 128)
    h2p = _round_up(H2, 128)
    zp = _round_up(num_z, 128)
    std = params["std"].astype(f32)

    def pad2(a, rows, cols):
        a = a.astype(f32)
        return jnp.pad(a, ((0, rows - a.shape[0]), (0, cols - a.shape[1])))

    # Folds are exact (x only feeds the Scalar head); done in f32, cast once.
    T1 = jnp.dot(params["embedding"].astype(f32), params["W1"].astype(f32),
                 preferred_element_type=f32)                               # (num_z, H)
    W2o1 = jnp.dot(params["W2"].astype(f32), params["Wo1"].astype(f32),
                   preferred_element_type=f32)                             # (H, H2)
    b2o1 = jnp.dot(params["b2"].astype(f32), params["Wo1"].astype(f32),
                   preferred_element_type=f32) + params["bo1"].astype(f32)  # (1, H2)

    wo2_row = (params["Wo2"].astype(f32) * std).reshape(1, H2)  # std folded into head
    head_bias = (params["bo2"].astype(f32) * std).reshape(1, 1)  # std * bo2 scalar

    return dict(
        T1=pad2(T1, zp, hp).astype(compute_dtype),
        b1=pad2(params["b1"], 1, hp),
        W2o1=pad2(W2o1, hp, h2p).astype(compute_dtype),
        b2o1=pad2(b2o1, 1, h2p),
        wo2=pad2(wo2_row, 1, h2p),
        head_bias=head_bias,
        mean=params["mean"].astype(f32),
        numz_pad=zp, hidden_pad=hp, head_pad=h2p, compute_dtype=compute_dtype,
    )


# -----------------------------------------------------------------------------
# Wrapper mirroring TorchMD_Net.forward -> (out, noise_pred, dy)
# -----------------------------------------------------------------------------
def torchmd_net_forward(z, pos, batch, prepared, num_molecules, *, tile_n=1024):
    # TODO(synk): this synthetic representation model is position-independent and
    # the equivariant features `v` are unused by the Scalar head, so `pos`/`v`
    # never enter the kernel; derivative=False so no force (-dy) autograd branch.
    del pos
    cdt = prepared["compute_dtype"]
    hp = prepared["hidden_pad"]
    h2p = prepared["head_pad"]
    zp = prepared["numz_pad"]

    if batch is None:
        batch = jnp.zeros_like(z)

    N = z.shape[0]
    B = int(num_molecules)

    # Atom tile: multiple of the sublane tiling for the compute dtype, and a
    # multiple of the scatter chunk.
    sub = 16 if jnp.dtype(cdt) == jnp.dtype(jnp.bfloat16) else 8
    tile_n = min(int(tile_n), _round_up(N, sub))
    tile_n = max(sub, (tile_n // sub) * sub)
    chunk = min(128, tile_n)
    tile_n = max(chunk, (tile_n // chunk) * chunk)
    n_pad = _round_up(N, tile_n)
    n_tiles = n_pad // tile_n

    # Split the atom axis across TensorCores (helps v7x; harmless on v5e/v6e).
    n_par = 2 if (n_tiles >= 2 and n_tiles % 2 == 0) else 1
    n_inner = n_tiles // n_par

    # Lane-dense molecule axis; last lane is a dump slot for padded atoms.
    # (Must be >= B+1 so the dump lane never collides with a real molecule id.)
    b_pad = _round_up(B + 1, 128)

    z2d = jnp.pad(z.astype(jnp.int32), (0, n_pad - N)).reshape(n_pad, 1)
    seg2d = jnp.pad(batch.astype(jnp.int32), (0, n_pad - N),
                    constant_values=b_pad - 1).reshape(n_pad, 1)

    itemsize = jnp.dtype(cdt).itemsize
    flops = n_pad * (2 * zp * hp + 2 * hp * h2p + 4 * h2p + 3 * b_pad)
    transcendentals = n_pad * (hp + h2p)
    bytes_accessed = (n_pad * 8 + n_par * b_pad * 4
                      + (zp * hp + hp * h2p) * itemsize + (hp + 2 * h2p + 1) * 4)

    kernel = functools.partial(torchmd_net_kernel, chunk=chunk)

    out_pad = pl.pallas_call(
        kernel,
        out_shape=jax.ShapeDtypeStruct((n_par, 1, b_pad), jnp.float32),
        grid=(n_par, n_inner),
        in_specs=[
            pl.BlockSpec((tile_n, 1), lambda i, j: (i * n_inner + j, 0)),  # z ids
            pl.BlockSpec((tile_n, 1), lambda i, j: (i * n_inner + j, 0)),  # segment ids
            pl.BlockSpec((zp, hp), lambda i, j: (0, 0)),     # T1 = emb @ W1 (resident)
            pl.BlockSpec((1, hp), lambda i, j: (0, 0)),      # b1
            pl.BlockSpec((hp, h2p), lambda i, j: (0, 0)),    # W2 @ Wo1 (resident)
            pl.BlockSpec((1, h2p), lambda i, j: (0, 0)),     # b2 @ Wo1 + bo1
            pl.BlockSpec((1, h2p), lambda i, j: (0, 0)),     # std * Wo2 row
            pl.BlockSpec(memory_space=pltpu.MemorySpace.SMEM),  # std * bo2 scalar
        ],
        out_specs=pl.BlockSpec((1, 1, b_pad), lambda i, j: (i, 0, 0)),
        compiler_params=pltpu.CompilerParams(
            dimension_semantics=("parallel", "arbitrary")),
        cost_estimate=pl.CostEstimate(
            flops=int(flops),
            transcendentals=int(transcendentals),
            bytes_accessed=int(bytes_accessed)),
    )(z2d, seg2d,
      prepared["T1"], prepared["b1"], prepared["W2o1"], prepared["b2o1"],
      prepared["wo2"], prepared["head_bias"])

    # post_reduce of the Scalar head is the identity; add mean in the wrapper.
    out = out_pad.sum(axis=(0, 1))[:B].reshape(B, 1) + prepared["mean"]

    noise_pred = None   # output_model_noise is None
    dy = None           # derivative = False
    return out, noise_pred, dy


# -----------------------------------------------------------------------------
# Pure-JAX references and parameter construction.
# -----------------------------------------------------------------------------
def _reference_forward(z, batch, params, num_molecules):
    """Mirrors the PyTorch forward with the original (unfolded) f32 parameters."""
    f32 = jnp.float32
    h0 = params["embedding"][z].astype(f32)
    t = _silu(jnp.dot(h0, params["W1"].astype(f32)) + params["b1"])
    x = jnp.dot(t, params["W2"].astype(f32)) + params["b2"]
    u = _silu(jnp.dot(x, params["Wo1"].astype(f32)) + params["bo1"])
    e = jnp.dot(u, params["Wo2"].astype(f32)) + params["bo2"]
    e = e * params["std"]
    out = jax.ops.segment_sum(e, batch, num_segments=num_molecules)
    return out + params["mean"]


def _reference_from_prepared(z, batch, prep, num_molecules):
    """Dtype-matched reference using the same folded tables the kernel consumes."""
    f32 = jnp.float32
    cdt = prep["compute_dtype"]
    t = _silu(prep["T1"][z].astype(f32) + prep["b1"])
    u = _silu(jnp.dot(t.astype(cdt), prep["W2o1"],
                      preferred_element_type=f32) + prep["b2o1"])
    e = jnp.sum(u * prep["wo2"], axis=-1, keepdims=True) + prep["head_bias"][0, 0]
    out = jax.ops.segment_sum(e, batch, num_segments=num_molecules)
    return out + prep["mean"]


def make_params(key, num_z, hidden):
    ks = jax.random.split(key, 9)
    h2 = hidden // 2
    scale = 0.1
    return {
        "embedding": scale * jax.random.normal(ks[0], (num_z, hidden), jnp.float32),
        "W1": scale * jax.random.normal(ks[1], (hidden, hidden), jnp.float32),
        "b1": scale * jax.random.normal(ks[2], (1, hidden), jnp.float32),
        "W2": scale * jax.random.normal(ks[3], (hidden, hidden), jnp.float32),
        "b2": scale * jax.random.normal(ks[4], (1, hidden), jnp.float32),
        "Wo1": scale * jax.random.normal(ks[5], (hidden, h2), jnp.float32),
        "bo1": scale * jax.random.normal(ks[6], (1, h2), jnp.float32),
        "Wo2": scale * jax.random.normal(ks[7], (h2, 1), jnp.float32),
        "bo2": scale * jax.random.normal(ks[8], (1, 1), jnp.float32),
        "std": jnp.float32(2.0),    # registered buffer `std`
        "mean": jnp.float32(0.1),   # registered buffer `mean`
    }


if __name__ == "__main__":
    key = jax.random.PRNGKey(0)
    k_par, k_z, k_pos = jax.random.split(key, 3)

    num_z = 10      # atom-type vocabulary
    hidden = 32     # hidden channels (zero-padded to 128 lanes inside)
    N = 32          # total atoms
    B = 4           # molecules in the batch

    params = make_params(k_par, num_z, hidden)

    z = jax.random.randint(k_z, (N,), 0, num_z, dtype=jnp.int32)   # atomic numbers
    pos = jax.random.normal(k_pos, (N, 3), jnp.float32)            # positions (unused)
    sizes = [10, 7, 9, 6]
    batch = jnp.concatenate([jnp.full((c,), m, jnp.int32) for m, c in enumerate(sizes)])

    ref = _reference_forward(z, batch, params, B)

    # ---- f32 path, small tile so the (parallel, arbitrary) grid split and the
    #      cross-tile accumulation are both exercised (grid = (2, 2)).
    prep32 = prepare_params(params, compute_dtype=jnp.float32)
    out, noise_pred, dy = torchmd_net_forward(z, pos, batch, prep32, B, tile_n=8)
    out = jax.block_until_ready(out)
    assert out.shape == (B, 1)
    assert noise_pred is None and dy is None
    ref32 = _reference_from_prepared(z, batch, prep32, B)
    assert jnp.allclose(out, ref32, atol=1e-4, rtol=1e-4), (out, ref32)
    assert jnp.allclose(out, ref, atol=1e-4, rtol=1e-4), (out, ref)

    # ---- default (large-tile) path: tile_n clamps to the padded atom count.
    out_big, _, _ = torchmd_net_forward(z, pos, batch, prep32, B)
    out_big = jax.block_until_ready(out_big)
    assert jnp.allclose(out_big, ref, atol=1e-4, rtol=1e-4), (out_big, ref)

    # ---- bf16 MXU operands (f32 accumulation + f32 elementwise), checked against
    #      a dtype-matched folded reference and loosely against the f32 reference.
    prep16 = prepare_params(params, compute_dtype=jnp.bfloat16)
    out16, _, _ = torchmd_net_forward(z, pos, batch, prep16, B, tile_n=16)
    out16 = jax.block_until_ready(out16)
    ref16 = _reference_from_prepared(z, batch, prep16, B)
    assert jnp.allclose(out16, ref16, atol=5e-3, rtol=5e-3), (out16, ref16)
    assert jnp.allclose(out16, ref, atol=5e-2, rtol=5e-2), (out16, ref)

    print("KERNEL_OK")
</pallas_src>

<mosaic_0001>
module attributes {stable_mosaic.version = 11 : i64} {
  func.func @torchmd_net_kernel(%arg0: i32, %arg1: i32, %arg2: memref<8x1xi32, #tpu.memory_space<vmem>>, %arg3: memref<8x1xi32, #tpu.memory_space<vmem>>, %arg4: memref<128x128xf32, #tpu.memory_space<vmem>>, %arg5: memref<1x128xf32, #tpu.memory_space<vmem>>, %arg6: memref<128x128xf32, #tpu.memory_space<vmem>>, %arg7: memref<1x128xf32, #tpu.memory_space<vmem>>, %arg8: memref<1x128xf32, #tpu.memory_space<vmem>>, %arg9: memref<1x1xf32, #tpu.memory_space<smem>>, %arg10: memref<1x1x128xf32, #tpu.memory_space<vmem>>) attributes {dimension_semantics = [#tpu.dimension_semantics<parallel>, #tpu.dimension_semantics<arbitrary>], iteration_bounds = array<i64: 2, 2>, scalar_prefetch = 0 : i64, scratch_operands = 0 : i64, tpu.core_type = #tpu.core_type<tc>, window_params = [{transform_indices = @transform_0, window_bounds = array<i64: 8, 1>}, {transform_indices = @transform_1, window_bounds = array<i64: 8, 1>}, {pipeline_mode = #tpu.pipeline_mode<synchronous>, transform_indices = @transform_2, window_bounds = array<i64: 128, 128>}, {pipeline_mode = #tpu.pipeline_mode<synchronous>, transform_indices = @transform_3, window_bounds = array<i64: 1, 128>}, {pipeline_mode = #tpu.pipeline_mode<synchronous>, transform_indices = @transform_4, window_bounds = array<i64: 128, 128>}, {pipeline_mode = #tpu.pipeline_mode<synchronous>, transform_indices = @transform_5, window_bounds = array<i64: 1, 128>}, {pipeline_mode = #tpu.pipeline_mode<synchronous>, transform_indices = @transform_6, window_bounds = array<i64: 1, 128>}, {transform_indices = @transform_7, window_bounds = array<i64: 1, 1>}, {transform_indices = @transform_8, window_bounds = array<i64: 1, 1, 128>}]} {
    %c0_i32 = arith.constant 0 : i32
    %0 = arith.cmpi eq, %arg1, %c0_i32 : i32
    %1 = arith.extui %0 : i1 to i32
    %c0_i32_0 = arith.constant 0 : i32
    %2 = arith.cmpi ne, %1, %c0_i32_0 : i32
    scf.if %2 {
      %cst_31 = arith.constant 0.000000e+00 : f32
      %56 = vector.broadcast %cst_31 : f32 to vector<1x1x128xf32>
      %c0_32 = arith.constant 0 : index
      %c0_33 = arith.constant 0 : index
      %c0_34 = arith.constant 0 : index
      %57 = vector.load %arg10[%c0_32, %c0_33, %c0_34] : memref<1x1x128xf32, #tpu.memory_space<vmem>>, vector<1x1x128xf32>
      tpu.vector_store %arg10[%c0_32, %c0_33, %c0_34], %56 {strides = array<i32>} : memref<1x1x128xf32, #tpu.memory_space<vmem>>, vector<1x1x128xf32>,
    } else {
    }
    %c0 = arith.constant 0 : index
    %c0_1 = arith.constant 0 : index
    %3 = vector.load %arg2[%c0, %c0_1] : memref<8x1xi32, #tpu.memory_space<vmem>>, vector<8x1xi32>
    %4 = tpu.iota {dimensions = array<i32: 1>} : vector<8x128xi32>
    %5 = vector.broadcast %3 : vector<8x1xi32> to vector<8x128xi32>
    %6 = arith.cmpi eq, %4, %5 : vector<8x128xi32>
    %cst = arith.constant 1.000000e+00 : f32
    %cst_2 = arith.constant 0.000000e+00 : f32
    %7 = vector.broadcast %cst : f32 to vector<8x128xf32>
    %8 = vector.broadcast %cst_2 : f32 to vector<8x128xf32>
    %9 = arith.select %6, %7, %8 : vector<8x128xi1>, vector<8x128xf32>
    %c0_3 = arith.constant 0 : index
    %c0_4 = arith.constant 0 : index
    %10 = vector.load %arg4[%c0_3, %c0_4] : memref<128x128xf32, #tpu.memory_space<vmem>>, vector<128x128xf32>
    %cst_5 = arith.constant dense<0.000000e+00> : vector<8x128xf32>
    %11 = tpu.matmul %9, %10, %cst_5 {dimension_numbers = #tpu.dot_dimension_numbers<[1], [0], [0], [1], [0, 0, 1, 1], [], []>} : vector<8x128xf32>, vector<128x128xf32>, vector<8x128xf32> -> vector<8x128xf32>
    %c0_6 = arith.constant 0 : index
    %c0_7 = arith.constant 0 : index
    %12 = vector.load %arg5[%c0_6, %c0_7] : memref<1x128xf32, #tpu.memory_space<vmem>>, vector<1x128xf32>
    %13 = vector.broadcast %12 : vector<1x128xf32> to vector<8x128xf32>
    %14 = arith.addf %11, %13 : vector<8x128xf32>
    %15 = arith.negf %14 : vector<8x128xf32>
    %16 = math.exp %15 : vector<8x128xf32>
    %cst_8 = arith.constant 1.000000e+00 : f32
    %17 = vector.broadcast %cst_8 : f32 to vector<8x128xf32>
    %18 = arith.addf %17, %16 : vector<8x128xf32>
    %19 = arith.divf %17, %18 : vector<8x128xf32>
    %20 = arith.mulf %14, %19 : vector<8x128xf32>
    %c0_9 = arith.constant 0 : index
    %c0_10 = arith.constant 0 : index
    %21 = vector.load %arg6[%c0_9, %c0_10] : memref<128x128xf32, #tpu.memory_space<vmem>>, vector<128x128xf32>
    %cst_11 = arith.constant dense<0.000000e+00> : vector<8x128xf32>
    %22 = tpu.matmul %20, %21, %cst_11 {dimension_numbers = #tpu.dot_dimension_numbers<[1], [0], [0], [1], [0, 0, 1, 1], [], []>} : vector<8x128xf32>, vector<128x128xf32>, vector<8x128xf32> -> vector<8x128xf32>
    %c0_12 = arith.constant 0 : index
    %c0_13 = arith.constant 0 : index
    %23 = vector.load %arg7[%c0_12, %c0_13] : memref<1x128xf32, #tpu.memory_space<vmem>>, vector<1x128xf32>
    %24 = vector.broadcast %23 : vector<1x128xf32> to vector<8x128xf32>
    %25 = arith.addf %22, %24 : vector<8x128xf32>
    %26 = arith.negf %25 : vector<8x128xf32>
    %27 = math.exp %26 : vector<8x128xf32>
    %cst_14 = arith.constant 1.000000e+00 : f32
    %28 = vector.broadcast %cst_14 : f32 to vector<8x128xf32>
    %29 = arith.addf %28, %27 : vector<8x128xf32>
    %30 = arith.divf %28, %29 : vector<8x128xf32>
    %31 = arith.mulf %25, %30 : vector<8x128xf32>
    %c0_15 = arith.constant 0 : index
    %c0_16 = arith.constant 0 : index
    %32 = vector.load %arg8[%c0_15, %c0_16] : memref<1x128xf32, #tpu.memory_space<vmem>>, vector<1x128xf32>
    %33 = vector.broadcast %32 : vector<1x128xf32> to vector<8x128xf32>
    %34 = arith.mulf %31, %33 : vector<8x128xf32>
    %cst_17 = arith.constant dense<0.000000e+00> : vector<8xf32>
    %35 = vector.multi_reduction <add>, %34, %cst_17 [1] : vector<8x128xf32> to vector<8xf32>
    %36 = vector.shape_cast %35 : vector<8xf32> to vector<8x1xf32>
    %c0_18 = arith.constant 0 : index
    %c0_19 = arith.constant 0 : index
    %37 = memref.load %arg9[%c0_18, %c0_19] : memref<1x1xf32, #tpu.memory_space<smem>>
    %38 = vector.broadcast %37 : f32 to vector<8x1xf32>
    %39 = arith.addf %36, %38 : vector<8x1xf32>
    %c0_20 = arith.constant 0 : index
    %c0_21 = arith.constant 0 : index
    %40 = vector.load %arg3[%c0_20, %c0_21] : memref<8x1xi32, #tpu.memory_space<vmem>>, vector<8x1xi32>
    %41 = tpu.iota {dimensions = array<i32: 1>} : vector<8x128xi32>
    %cst_22 = arith.constant 0.000000e+00 : f32
    %42 = vector.broadcast %cst_22 : f32 to vector<1x128xf32>
    %43 = vector.broadcast %40 : vector<8x1xi32> to vector<8x128xi32>
    %44 = arith.cmpi eq, %41, %43 : vector<8x128xi32>
    %cst_23 = arith.constant 0.000000e+00 : f32
    %45 = vector.shape_cast %39 : vector<8x1xf32> to vector<8x1xf32>
    %46 = vector.broadcast %45 : vector<8x1xf32> to vector<8x128xf32>
    %47 = vector.broadcast %cst_23 : f32 to vector<8x128xf32>
    %48 = arith.select %44, %46, %47 : vector<8x128xi1>, vector<8x128xf32>
    %cst_24 = arith.constant dense<0.000000e+00> : vector<128xf32>
    %49 = vector.multi_reduction <add>, %48, %cst_24 [0] : vector<8x128xf32> to vector<128xf32>
    %50 = vector.shape_cast %49 : vector<128xf32> to vector<1x128xf32>
    %51 = arith.addf %42, %50 : vector<1x128xf32>
    %c0_25 = arith.constant 0 : index
    %c0_26 = arith.constant 0 : index
    %c0_27 = arith.constant 0 : index
    %52 = vector.load %arg10[%c0_25, %c0_26, %c0_27] : memref<1x1x128xf32, #tpu.memory_space<vmem>>, vector<1x1x128xf32>
    %53 = vector.shape_cast %51 : vector<1x128xf32> to vector<1x1x128xf32>
    %54 = arith.addf %52, %53 : vector<1x1x128xf32>
    %c0_28 = arith.constant 0 : index
    %c0_29 = arith.constant 0 : index
    %c0_30 = arith.constant 0 : index
    %55 = vector.load %arg10[%c0_28, %c0_29, %c0_30] : memref<1x1x128xf32, #tpu.memory_space<vmem>>, vector<1x1x128xf32>
    tpu.vector_store %arg10[%c0_28, %c0_29, %c0_30], %54 {strides = array<i32>} : memref<1x1x128xf32, #tpu.memory_space<vmem>>, vector<1x1x128xf32>,
    return
  }
  func.func @transform_0(%arg0: i32, %arg1: i32) -> (i32, i32) {
    %c2_i32 = arith.constant 2 : i32
    %0 = arith.muli %arg0, %c2_i32 : i32
    %1 = arith.addi %0, %arg1 : i32
    %c0_i32 = arith.constant 0 : i32
    %c0_i32_0 = arith.constant 0 : i32
    return %1, %c0_i32 : i32, i32
  }
  func.func @transform_1(%arg0: i32, %arg1: i32) -> (i32, i32) {
    %c2_i32 = arith.constant 2 : i32
    %0 = arith.muli %arg0, %c2_i32 : i32
    %1 = arith.addi %0, %arg1 : i32
    %c0_i32 = arith.constant 0 : i32
    %c0_i32_0 = arith.constant 0 : i32
    return %1, %c0_i32 : i32, i32
  }
  func.func @transform_2(%arg0: i32, %arg1: i32) -> (i32, i32) {
    %c0_i32 = arith.constant 0 : i32
    %c0_i32_0 = arith.constant 0 : i32
    %c0_i32_1 = arith.constant 0 : i32
    return %c0_i32, %c0_i32_0 : i32, i32
  }
  func.func @transform_3(%arg0: i32, %arg1: i32) -> (i32, i32) {
    %c0_i32 = arith.constant 0 : i32
    %c0_i32_0 = arith.constant 0 : i32
    %c0_i32_1 = arith.constant 0 : i32
    return %c0_i32, %c0_i32_0 : i32, i32
  }
  func.func @transform_4(%arg0: i32, %arg1: i32) -> (i32, i32) {
    %c0_i32 = arith.constant 0 : i32
    %c0_i32_0 = arith.constant 0 : i32
    %c0_i32_1 = arith.constant 0 : i32
    return %c0_i32, %c0_i32_0 : i32, i32
  }
  func.func @transform_5(%arg0: i32, %arg1: i32) -> (i32, i32) {
    %c0_i32 = arith.constant 0 : i32
    %c0_i32_0 = arith.constant 0 : i32
    %c0_i32_1 = arith.constant 0 : i32
    return %c0_i32, %c0_i32_0 : i32, i32
  }
  func.func @transform_6(%arg0: i32, %arg1: i32) -> (i32, i32) {
    %c0_i32 = arith.constant 0 : i32
    %c0_i32_0 = arith.constant 0 : i32
    %c0_i32_1 = arith.constant 0 : i32
    return %c0_i32, %c0_i32_0 : i32, i32
  }
  func.func @transform_7(%arg0: i32, %arg1: i32) -> (i32, i32) {
    %c0_i32 = arith.constant 0 : i32
    %c0_i32_0 = arith.constant 0 : i32
    %c0_i32_1 = arith.constant 0 : i32
    return %c0_i32, %c0_i32_0 : i32, i32
  }
  func.func @transform_8(%arg0: i32, %arg1: i32) -> (i32, i32, i32) {
    %c0_i32 = arith.constant 0 : i32
    %c0_i32_0 = arith.constant 0 : i32
    %c0_i32_1 = arith.constant 0 : i32
    return %arg0, %c0_i32, %c0_i32_0 : i32, i32, i32
  }
}

</mosaic_0001>

<llo_original>
// kernel: tpu_custom_call.1
$region0: #{tpu_custom_call.1}
  #allocation0 [shape = 'u32[]', space=smem, size = 0x4, offset = 0x4, fixed_abs, tag = 'smem constant byte address 0x4 - core index']
  #allocation1 [shape = 'u32[144,128]{1,0:T(1,128)}', space=vmem, size = 0x12000, scoped, tag = 'internal scratch']
  #allocation2 [shape = 'f32[1,1]{1,0:T(1,128)S(6)}', space=smem, size = 0x200, scoped, tag = 'scoped memory for tpu_custom_call.1']
  %s0 = inlined_call_operand.vmem [shape: s32[32,1], index: 0, kind: input, shape index: {}]
  %s1 = inlined_call_operand.vmem [shape: s32[32,1], index: 1, kind: input, shape index: {}]
  %s2 = inlined_call_operand.hbm [shape: f32[128,128], index: 2, kind: input, shape index: {}]
  %s3 = inlined_call_operand.vmem [shape: f32[1,128], index: 3, kind: input, shape index: {}]
  %s4 = inlined_call_operand.hbm [shape: f32[128,128], index: 4, kind: input, shape index: {}]
  %s5 = inlined_call_operand.vmem [shape: f32[1,128], index: 5, kind: input, shape index: {}]
  %s6 = inlined_call_operand.vmem [shape: f32[1,128], index: 6, kind: input, shape index: {}]
  %s7 = inlined_call_operand.<no memory space> [shape: f32[1,1], index: 7, kind: input, shape index: {}]
  %s8 = inlined_call_operand.hbm [shape: f32[2,1,128], index: 8, kind: output, shape index: {}]
  %s9 = sld [smem:[#allocation0]]
  $region77: #{tpu_custom_call.1} parent=0
    _
  %s11 = ssub.s32 1, %s9
  %s12 = scalar_select 0, %s11, %s9
  %13 = sst [smem:[#allocation2]] %s7
  $region1: #{tpu_custom_call.1} parent=0
    #allocation3 [shape = 'u8[65536]{0}', space=vmem, size = 0x10000, scoped, tag = 'input window, operand 2, single buffered']
    #allocation4 [shape = 's32[2]{0}', space=sflag, size = 0x8, scoped, tag = 'scoped memory for tpu_custom_call.1']
    #allocation5 [shape = 's32[2]{0}', space=sflag, size = 0x8, scoped, tag = 'scoped memory for tpu_custom_call.1']
    #allocation6 [shape = 'u8[65536]{0}', space=vmem, size = 0x10000, scoped, tag = 'input window, operand 4, single buffered']
    #allocation7 [shape = 's32[1]{0}', space=sflag, size = 0x4, scoped, tag = 'scoped memory for tpu_custom_call.1']
    #allocation8 [shape = 'u8[1024]{0}', space=vmem, size = 0x400, scoped, tag = 'output window, operand 0']
    %14 = vsyncpa [#allocation4], 0
    %15 = vsyncpa [#allocation7], 0
    %16 = vsyncpa [#allocation5], 0
    %s17 = scalar_lea.sflag [#allocation5], 1
    %18 = vsyncpa %s17, 0
    loop: start=0, step=1, limit=6
    $region2: #{tpu_custom_call.1} parent=1 // loop_pre_header
      _
    $region3: #{tpu_custom_call.1} parent=1 // loop_header
      %s20 = sphi 0, %s24
      %p21 = scmp.ge.s32.totalorder %s20, 6
      %s27 = sphi 0, %s39
      %s28 = sphi 0, %s35
      %s29 = sphi 0, %s27
      %s30 = sphi 0, %s28
      %s31 = sphi 0, %s29
      %s32 = sphi 0, %s30
      %s46 = sphi 0, %s48
      %s49 = sphi 0, %s46
      %s50 = sphi 0, %s49
      %s66 = sphi 0, %s50
      %s76 = sphi 0, %s78
      %s79 = sphi 0, %s76
      %s80 = sphi 0, %s79
      %s96 = sphi 0, %s80
      %s100 = sphi 0, %s100
      %s102 = sphi 0, %s100
      %s103 = sphi 0, %s102
      %s117 = sphi 0, %s103
      %s121 = sphi 0, %s121
      %s123 = sphi 0, %s121
      %s124 = sphi 0, %s123
      %s138 = sphi 0, %s124
      %s142 = sphi 0, %s142
      %s144 = sphi 0, %s142
      %s145 = sphi 0, %s144
      %s159 = sphi 0, %s145
      %s163 = sphi 0, %s163
      %s165 = sphi 0, %s163
      %s166 = sphi 0, %s165
      %s180 = sphi 0, %s166
      %s184 = sphi 0, %s184
      %s186 = sphi 0, %s184
      %s187 = sphi 0, %s186
      %s201 = sphi 0, %s187
      %s205 = sphi 0, %s205
      %s207 = sphi 0, %s205
      %s208 = sphi 0, %s207
      %s222 = sphi 0, %s208
      %s228 = sphi 0, %s230
      %s231 = sphi 0, %s228
      %s232 = sphi 0, %s231
      %s248 = sphi 0, %s232
    $region4: #{tpu_custom_call.1} parent=1 // loop_header_branch
      %23 = sbr.rel (%p21) target = $region8
    $region5: #{tpu_custom_call.1} parent=1 // loop_body
      %s25 = ssub.s32 %s20, 1
      %s26 = ssub.s32 %s20, 2
      %s33 = sadd.s32 1, %s28
      %p34 = scmp.ge.s32.totalorder %s33, 2
      %s35 = scalar_select %p34, 0, %s33
      %s36 = sadd.s32 1, %s27
      %s37 = scalar_select %p34, %s36, %s27
      %p38 = scmp.ge.s32.totalorder %s37, 2
      %s39 = scalar_select %p38, 0, %s37
      %s40 = smul.u32 %s27, 2
      %s41 = sadd.s32 %s40, %s28
      %s42 = smul.u32 %s39, 2
      %s43 = sadd.s32 %s42, %s35
      %s44 = ssub.s32 %s41, %s43
      %p45 = scmp.eq.s32.totalorder %s44, 0
      %s47 = sadd.s32 %s46, 1
      %s48 = scalar_select %p45, %s46, %s47
      %p51 = pneg %p45
      %p52 = scmp.eq.s32.totalorder %s20, 3
      %p53 = por %p51, %p52
      %p54 = scmp.ne.s32.totalorder %s46, %s49
      %p55 = scmp.eq.s32.totalorder %s20, 0
      %p56 = por %p54, %p55
      %p57 = scmp.ne.s32.totalorder %s46, %s49
      %p58 = scmp.eq.s32.totalorder %s25, 3
      %p59 = por %p57, %p58
      %p60 = scmp.ne.s32.totalorder %s49, %s50
      %p61 = scmp.eq.s32.totalorder %s25, 0
      %p62 = por %p60, %p61
      %p63 = scmp.ne.s32.totalorder %s49, %s50
      %p64 = scmp.eq.s32.totalorder %s26, 3
      %p65 = por %p63, %p64
      %p67 = scmp.ne.s32.totalorder %s50, %s66
      %p68 = scmp.eq.s32.totalorder %s26, 0
      %p69 = por %p67, %p68
      %s70 = smul.u32 %s27, 2
      %s71 = sadd.s32 %s70, %s28
      %s72 = smul.u32 %s39, 2
      %s73 = sadd.s32 %s72, %s35
      %s74 = ssub.s32 %s71, %s73
      %p75 = scmp.eq.s32.totalorder %s74, 0
      %s77 = sadd.s32 %s76, 1
      %s78 = scalar_select %p75, %s76, %s77
      %p81 = pneg %p75
      %p82 = scmp.eq.s32.totalorder %s20, 3
      %p83 = por %p81, %p82
      %p84 = scmp.ne.s32.totalorder %s76, %s79
      %p85 = scmp.eq.s32.totalorder %s20, 0
      %p86 = por %p84, %p85
      %p87 = scmp.ne.s32.totalorder %s76, %s79
      %p88 = scmp.eq.s32.totalorder %s25, 3
      %p89 = por %p87, %p88
      %p90 = scmp.ne.s32.totalorder %s79, %s80
      %p91 = scmp.eq.s32.totalorder %s25, 0
      %p92 = por %p90, %p91
      %p93 = scmp.ne.s32.totalorder %s79, %s80
      %p94 = scmp.eq.s32.totalorder %s26, 3
      %p95 = por %p93, %p94
      %p97 = scmp.ne.s32.totalorder %s80, %s96
      %p98 = scmp.eq.s32.totalorder %s26, 0
      %p99 = por %p97, %p98
      %s101 = sadd.s32 %s100, 1
      %p104 = scmp.eq.s32.totalorder %s20, 3
      %p105 = scmp.ne.s32.totalorder %s100, %s102
      %p106 = scmp.eq.s32.totalorder %s20, 0
      %p107 = por %p105, %p106
      %p108 = scmp.ne.s32.totalorder %s100, %s102
      %p109 = scmp.eq.s32.totalorder %s25, 3
      %p110 = por %p108, %p109
      %p111 = scmp.ne.s32.totalorder %s102, %s103
      %p112 = scmp.eq.s32.totalorder %s25, 0
      %p113 = por %p111, %p112
      %p114 = scmp.ne.s32.totalorder %s102, %s103
      %p115 = scmp.eq.s32.totalorder %s26, 3
      %p116 = por %p114, %p115
      %p118 = scmp.ne.s32.totalorder %s103, %s117
      %p119 = scmp.eq.s32.totalorder %s26, 0
      %p120 = por %p118, %p119
      %s122 = sadd.s32 %s121, 1
      %p125 = scmp.eq.s32.totalorder %s20, 3
      %p126 = scmp.ne.s32.totalorder %s121, %s123
      %p127 = scmp.eq.s32.totalorder %s20, 0
      %p128 = por %p126, %p127
      %p129 = scmp.ne.s32.totalorder %s121, %s123
      %p130 = scmp.eq.s32.totalorder %s25, 3
      %p131 = por %p129, %p130
      %p132 = scmp.ne.s32.totalorder %s123, %s124
      %p133 = scmp.eq.s32.totalorder %s25, 0
      %p134 = por %p132, %p133
      %p135 = scmp.ne.s32.totalorder %s123, %s124
      %p136 = scmp.eq.s32.totalorder %s26, 3
      %p137 = por %p135, %p136
      %p139 = scmp.ne.s32.totalorder %s124, %s138
      %p140 = scmp.eq.s32.totalorder %s26, 0
      %p141 = por %p139, %p140
      %s143 = sadd.s32 %s142, 1
      %p146 = scmp.eq.s32.totalorder %s20, 3
      %p147 = scmp.ne.s32.totalorder %s142, %s144
      %p148 = scmp.eq.s32.totalorder %s20, 0
      %p149 = por %p147, %p148
      %p150 = scmp.ne.s32.totalorder %s142, %s144
      %p151 = scmp.eq.s32.totalorder %s25, 3
      %p152 = por %p150, %p151
      %p153 = scmp.ne.s32.totalorder %s144, %s145
      %p154 = scmp.eq.s32.totalorder %s25, 0
      %p155 = por %p153, %p154
      %p156 = scmp.ne.s32.totalorder %s144, %s145
      %p157 = scmp.eq.s32.totalorder %s26, 3
      %p158 = por %p156, %p157
      %p160 = scmp.ne.s32.totalorder %s145, %s159
      %p161 = scmp.eq.s32.totalorder %s26, 0
      %p162 = por %p160, %p161
      %s164 = sadd.s32 %s163, 1
      %p167 = scmp.eq.s32.totalorder %s20, 3
      %p168 = scmp.ne.s32.totalorder %s163, %s165
      %p169 = scmp.eq.s32.totalorder %s20, 0
      %p170 = por %p168, %p169
      %p171 = scmp.ne.s32.totalorder %s163, %s165
      %p172 = scmp.eq.s32.totalorder %s25, 3
      %p173 = por %p171, %p172
      %p174 = scmp.ne.s32.totalorder %s165, %s166
      %p175 = scmp.eq.s32.totalorder %s25, 0
      %p176 = por %p174, %p175
      %p177 = scmp.ne.s32.totalorder %s165, %s166
      %p178 = scmp.eq.s32.totalorder %s26, 3
      %p179 = por %p177, %p178
      %p181 = scmp.ne.s32.totalorder %s166, %s180
      %p182 = scmp.eq.s32.totalorder %s26, 0
      %p183 = por %p181, %p182
      %s185 = sadd.s32 %s184, 1
      %p188 = scmp.eq.s32.totalorder %s20, 3
      %p189 = scmp.ne.s32.totalorder %s184, %s186
      %p190 = scmp.eq.s32.totalorder %s20, 0
      %p191 = por %p189, %p190
      %p192 = scmp.ne.s32.totalorder %s184, %s186
      %p193 = scmp.eq.s32.totalorder %s25, 3
      %p194 = por %p192, %p193
      %p195 = scmp.ne.s32.totalorder %s186, %s187
      %p196 = scmp.eq.s32.totalorder %s25, 0
      %p197 = por %p195, %p196
      %p198 = scmp.ne.s32.totalorder %s186, %s187
      %p199 = scmp.eq.s32.totalorder %s26, 3
      %p200 = por %p198, %p199
      %p202 = scmp.ne.s32.totalorder %s187, %s201
      %p203 = scmp.eq.s32.totalorder %s26, 0
      %p204 = por %p202, %p203
      %s206 = sadd.s32 %s205, 1
      %p209 = scmp.eq.s32.totalorder %s20, 3
      %p210 = scmp.ne.s32.totalorder %s205, %s207
      %p211 = scmp.eq.s32.totalorder %s20, 0
      %p212 = por %p210, %p211
      %p213 = scmp.ne.s32.totalorder %s205, %s207
      %p214 = scmp.eq.s32.totalorder %s25, 3
      %p215 = por %p213, %p214
      %p216 = scmp.ne.s32.totalorder %s207, %s208
      %p217 = scmp.eq.s32.totalorder %s25, 0
      %p218 = por %p216, %p217
      %p219 = scmp.ne.s32.totalorder %s207, %s208
      %p220 = scmp.eq.s32.totalorder %s26, 3
      %p221 = por %p219, %p220
      %p223 = scmp.ne.s32.totalorder %s208, %s222
      %p224 = scmp.eq.s32.totalorder %s26, 0
      %p225 = por %p223, %p224
      %s226 = ssub.s32 %s27, %s39
      %p227 = scmp.eq.s32.totalorder %s226, 0
      %s229 = sadd.s32 %s228, 1
      %s230 = scalar_select %p227, %s228, %s229
      %p233 = pneg %p227
      %p234 = scmp.eq.s32.totalorder %s20, 3
      %p235 = por %p233, %p234
      %p236 = scmp.ne.s32.totalorder %s228, %s231
      %p237 = scmp.eq.s32.totalorder %s20, 0
      %p238 = por %p236, %p237
      %p239 = scmp.ne.s32.totalorder %s228, %s231
      %p240 = scmp.eq.s32.totalorder %s25, 3
      %p241 = por %p239, %p240
      %p242 = scmp.ne.s32.totalorder %s231, %s232
      %p243 = scmp.eq.s32.totalorder %s25, 0
      %p244 = por %p242, %p243
      %p245 = scmp.ne.s32.totalorder %s231, %s232
      %p246 = scmp.eq.s32.totalorder %s26, 3
      %p247 = por %p245, %p246
      %p249 = scmp.ne.s32.totalorder %s232, %s248
      %p250 = scmp.eq.s32.totalorder %s26, 0
      %p251 = por %p249, %p250
      %p252 = scmp.le.s32.totalorder 1, %s20
      %p253 = scmp.lt.s32.totalorder %s20, 5
      %p254 = pnand %p252, %p253
      %p255 = pneg %p254
      // Predicated region
      $region9: #{tpu_custom_call.1} parent=5 // pred_check
        _
      $region10: #{tpu_custom_call.1} parent=5 // pred_check_branch
        %257 = sbr.rel (%p254) target = $region12
      $region11: #{tpu_custom_call.1} parent=5 // pred_region
        %s258 = ssub.s32 %s20, 1
        // Predicated region
        $region13: #{tpu_custom_call.1} parent=11 // pred_check
          %p259 = pneg %p113
        $region14: #{tpu_custom_call.1} parent=11 // pred_check_branch
          %261 = sbr.rel (%p259) target = $region16
        $region15: #{tpu_custom_call.1} parent=11 // pred_region
          %s263 = ssub.s32 2048, 2048
          %264 = vsyncadd [#allocation4], %s263
          %s265 = sshll.u32 [#allocation3], 4
          %s266 = int_to_ptr.vmem [resolvable:$true] %s265
          %271 = dma.hbm_to_vmem [thread:$0]  %s2, 2048, %s266, [#allocation4], 128, 128, 8
        $region16: #{tpu_custom_call.1} parent=11 // pred_fallthru
          _
        // Predicated region
        $region17: #{tpu_custom_call.1} parent=11 // pred_check
          %p272 = pneg %p134
        $region18: #{tpu_custom_call.1} parent=11 // pred_check_branch
          %274 = sbr.rel (%p272) target = $region20
        $region19: #{tpu_custom_call.1} parent=11 // pred_region
          _
        $region20: #{tpu_custom_call.1} parent=11 // pred_fallthru
          _
        // Predicated region
        $region21: #{tpu_custom_call.1} parent=11 // pred_check
          %p275 = pneg %p155
        $region22: #{tpu_custom_call.1} parent=11 // pred_check_branch
          %277 = sbr.rel (%p275) target = $region24
        $region23: #{tpu_custom_call.1} parent=11 // pred_region
          %s279 = ssub.s32 2048, 2048
          %280 = vsyncadd [#allocation7], %s279
          %s281 = sshll.u32 [#allocation6], 4
          %s282 = int_to_ptr.vmem [resolvable:$true] %s281
          %287 = dma.hbm_to_vmem [thread:$0]  %s4, 2048, %s282, [#allocation7], 128, 128, 8
        $region24: #{tpu_custom_call.1} parent=11 // pred_fallthru
          _
        // Predicated region
        $region25: #{tpu_custom_call.1} parent=11 // pred_check
          %p288 = pneg %p176
        $region26: #{tpu_custom_call.1} parent=11 // pred_check_branch
          %290 = sbr.rel (%p288) target = $region28
        $region27: #{tpu_custom_call.1} parent=11 // pred_region
          _
        $region28: #{tpu_custom_call.1} parent=11 // pred_fallthru
          _
        // Predicated region
        $region29: #{tpu_custom_call.1} parent=11 // pred_check
          %p291 = pneg %p197
        $region30: #{tpu_custom_call.1} parent=11 // pred_check_branch
          %293 = sbr.rel (%p291) target = $region32
        $region31: #{tpu_custom_call.1} parent=11 // pred_region
          _
        $region32: #{tpu_custom_call.1} parent=11 // pred_fallthru
          _
        // Predicated region
        $region33: #{tpu_custom_call.1} parent=11 // pred_check
          %p294 = pneg %p218
        $region34: #{tpu_custom_call.1} parent=11 // pred_check_branch
          %296 = sbr.rel (%p294) target = $region36
        $region35: #{tpu_custom_call.1} parent=11 // pred_region
          _
        $region36: #{tpu_custom_call.1} parent=11 // pred_fallthru
          _
      $region12: #{tpu_custom_call.1} parent=5 // pred_fallthru
        _
      %p297 = scmp.lt.s32.totalorder %s20, 4
      // Predicated region
      $region37: #{tpu_custom_call.1} parent=5 // pred_check
        %p298 = pneg %p297
      $region38: #{tpu_custom_call.1} parent=5 // pred_check_branch
        %300 = sbr.rel (%p298) target = $region40
      $region39: #{tpu_custom_call.1} parent=5 // pred_region
        // Predicated region
        $region41: #{tpu_custom_call.1} parent=39 // pred_check
          %p301 = pneg %p56
        $region42: #{tpu_custom_call.1} parent=39 // pred_check_branch
          %303 = sbr.rel (%p301) target = $region44
        $region43: #{tpu_custom_call.1} parent=39 // pred_region
          %s304 = smul.u32 %s27, 2
          %s305 = sadd.s32 %s304, %s28
          %p306 = scmp.lt.s32.totalorder %s305, 3
          %s307 = scalar_select %p306, %s305, 3
          %s308 = smul.addr %s307, 8
          %s309 = scalar_lea.vmem %s0, %s308
          %s310 = smul.u32 %s27, 2
          %s311 = sadd.s32 %s310, %s28
        $region44: #{tpu_custom_call.1} parent=39 // pred_fallthru
          _
        // Predicated region
        $region45: #{tpu_custom_call.1} parent=39 // pred_check
          %p312 = pneg %p86
        $region46: #{tpu_custom_call.1} parent=39 // pred_check_branch
          %314 = sbr.rel (%p312) target = $region48
        $region47: #{tpu_custom_call.1} parent=39 // pred_region
          %s315 = smul.u32 %s27, 2
          %s316 = sadd.s32 %s315, %s28
          %p317 = scmp.lt.s32.totalorder %s316, 3
          %s318 = scalar_select %p317, %s316, 3
          %s319 = smul.addr %s318, 8
          %s320 = scalar_lea.vmem %s1, %s319
          %s321 = smul.u32 %s27, 2
          %s322 = sadd.s32 %s321, %s28
        $region48: #{tpu_custom_call.1} parent=39 // pred_fallthru
          _
      $region40: #{tpu_custom_call.1} parent=5 // pred_fallthru
        _
      %p323 = scmp.le.s32.totalorder 1, %s20
      %p324 = scmp.lt.s32.totalorder %s20, 5
      %p325 = pnand %p323, %p324
      %p326 = pneg %p325
      // Predicated region
      $region49: #{tpu_custom_call.1} parent=5 // pred_check
        _
      $region50: #{tpu_custom_call.1} parent=5 // pred_check_branch
        %328 = sbr.rel (%p325) target = $region52
      $region51: #{tpu_custom_call.1} parent=5 // pred_region
        %s329 = ssub.s32 %s20, 1
        // Predicated region
        $region53: #{tpu_custom_call.1} parent=51 // pred_check
          %p330 = pneg %p113
        $region54: #{tpu_custom_call.1} parent=51 // pred_check_branch
          %332 = sbr.rel (%p330) target = $region56
        $region55: #{tpu_custom_call.1} parent=51 // pred_region
          %333 = dma.done [#allocation4], 2048
        $region56: #{tpu_custom_call.1} parent=51 // pred_fallthru
          _
        // Predicated region
        $region57: #{tpu_custom_call.1} parent=51 // pred_check
          %p334 = pneg %p155
        $region58: #{tpu_custom_call.1} parent=51 // pred_check_branch
          %336 = sbr.rel (%p334) target = $region60
        $region59: #{tpu_custom_call.1} parent=51 // pred_region
          %337 = dma.done [#allocation7], 2048
        $region60: #{tpu_custom_call.1} parent=51 // pred_fallthru
          _
        %s338 = smul.u32 %s29, 2
        %s339 = sadd.s32 %s338, %s30
        %p340 = scmp.lt.s32.totalorder %s339, 3
        %s341 = scalar_select %p340, %s339, 3
        %s342 = smul.addr %s341, 8
        %s343 = scalar_lea.vmem %s0, %s342
        %p344 = pneg %p62
        %p345 = pneg %p59
        %s346 = smul.u32 %s29, 2
        %s347 = sadd.s32 %s346, %s30
        %p348 = scmp.lt.s32.totalorder %s347, 3
        %s349 = scalar_select %p348, %s347, 3
        %s350 = smul.addr %s349, 8
        %s351 = scalar_lea.vmem %s1, %s350
        %p352 = pneg %p92
        %p353 = pneg %p89
        %p354 = pneg %p113
        %p355 = pneg %p110
        %p356 = pneg %p134
        %p357 = pneg %p131
        %p358 = pneg %p155
        %p359 = pneg %p152
        %p360 = pneg %p176
        %p361 = pneg %p173
        %p362 = pneg %p197
        %p363 = pneg %p194
        %p364 = pneg %p218
        %p365 = pneg %p215
        %p366 = pneg %p244
        %p367 = pneg %p241
        %s368 = sand.u32 %s231, 1
        %s369 = scalar_lea.sflag [#allocation5], %s368
        %s370 = sand.u32 %s231, 1
        %s371 = scalar_lea.vmem [#allocation8], %s370
        %s372 = smul.u32 %s29, 2
        %s373 = sadd.s32 %s372, %s30
        %p374 = scmp.lt.s32.totalorder %s373, 3
        %s375 = scalar_select %p374, %s373, 3
        %s376 = smul.addr %s375, 8
        %s377 = scalar_lea.vmem %s0, %s376
        %s378 = smul.u32 %s29, 2
        %s379 = sadd.s32 %s378, %s30
        %s380 = smul.u32 %s29, 2
        %s381 = sadd.s32 %s380, %s30
        %p382 = scmp.lt.s32.totalorder %s381, 3
        %s383 = scalar_select %p382, %s381, 3
        %s384 = smul.addr %s383, 8
        %s385 = scalar_lea.vmem %s1, %s384
        %s386 = smul.u32 %s29, 2
        %s387 = sadd.s32 %s386, %s30
        %p388 = scmp.eq.s32.totalorder %s30, 0
        // Predicated region
        $region61: #{tpu_custom_call.1} parent=51 // pred_check
          %p389 = pneg %p388
        $region62: #{tpu_custom_call.1} parent=51 // pred_check_branch
          %391 = sbr.rel (%p389) target = $region64
        $region63: #{tpu_custom_call.1} parent=51 // pred_region
          %392 = vst [vmem:[%s371] sm:$0x1] 0.0
        $region64: #{tpu_custom_call.1} parent=51 // pred_fallthru
          _
        %v393 = vld [vmem:[%s377] sm:$0xff]
        %v394 = vlaneseq
        %v395 = vand.u32 %v394, 127
        %396 = vset.pattern.permute.xlu0 0
        %397 = vperm.xlu0 %396, %v393
        %v398 = vpop.permute.xlu0 %397
        %vm399 = vcmp.eq.s32.totalorder %v395, %v398
        %v400 = vsel %vm399, 1.0, 0.0
        %v401 = vld [vmem:[#allocation3] sm:$0xff]
        %v402 = vld [vmem:[#allocation3 + $0x8] sm:$0xff]
        %v403 = vld [vmem:[#allocation3 + $0x10] sm:$0xff]
        %v404 = vld [vmem:[#allocation3 + $0x18] sm:$0xff]
        %v405 = vld [vmem:[#allocation3 + $0x20] sm:$0xff]
        %v406 = vld [vmem:[#allocation3 + $0x28] sm:$0xff]
        %v407 = vld [vmem:[#allocation3 + $0x30] sm:$0xff]
        %v408 = vld [vmem:[#allocation3 + $0x38] sm:$0xff]
        %v409 = vld [vmem:[#allocation3 + $0x40] sm:$0xff]
        %v410 = vld [vmem:[#allocation3 + $0x48] sm:$0xff]
        %v411 = vld [vmem:[#allocation3 + $0x50] sm:$0xff]
        %v412 = vld [vmem:[#allocation3 + $0x58] sm:$0xff]
        %v413 = vld [vmem:[#allocation3 + $0x60] sm:$0xff]
        %v414 = vld [vmem:[#allocation3 + $0x68] sm:$0xff]
        %v415 = vld [vmem:[#allocation3 + $0x70] sm:$0xff]
        %v416 = vld [vmem:[#allocation3 + $0x78] sm:$0xff]
        %v417 = vld [vmem:[%s3] sm:$0x1]
        %v419 = vlaneseq
        %v420 = vshrl.u32 %v419, 7
        %v421 = vsub.s32 0, %v420
        %v422 = vrot.slane %v417, %v421
        %424 = vmatprep.subr.mxu0 0.0
        %425 = vmatpush1.msra.mxu0 %v401
        %426 = vmatprep.subr.mxu0 0.0
        %427 = vmatpush1.msra.mxu0 %v402
        %428 = vmatprep.subr.mxu0 0.0
        %429 = vmatpush1.msra.mxu0 %v403
        %430 = vmatprep.subr.mxu0 0.0
        %431 = vmatpush1.msra.mxu0 %v404
        %432 = vmatprep.subr.mxu0 0.0
        %433 = vmatpush1.msra.mxu0 %v405
        %434 = vmatprep.subr.mxu0 0.0
        %435 = vmatpush1.msra.mxu0 %v406
        %436 = vmatprep.subr.mxu0 0.0
        %437 = vmatpush1.msra.mxu0 %v407
        %438 = vmatprep.subr.mxu0 0.0
        %439 = vmatpush1.msra.mxu0 %v408
        %440 = vmatprep.subr.mxu0 0.0
        %441 = vmatpush1.msra.mxu0 %v409
        %442 = vmatprep.subr.mxu0 0.0
        %443 = vmatpush1.msra.mxu0 %v410
        %444 = vmatprep.subr.mxu0 0.0
        %445 = vmatpush1.msra.mxu0 %v411
        %446 = vmatprep.subr.mxu0 0.0
        %447 = vmatpush1.msra.mxu0 %v412
        %448 = vmatprep.subr.mxu0 0.0
        %449 = vmatpush1.msra.mxu0 %v413
        %450 = vmatprep.subr.mxu0 0.0
        %451 = vmatpush1.msra.mxu0 %v414
        %452 = vmatprep.subr.mxu0 0.0
        %453 = vmatpush1.msra.mxu0 %v415
        %454 = vmatprep.subr.mxu0 0.0
        %455 = vmatpush1.msra.mxu0 %v416
        %456 = vmatprep.subr.mxu0 0.0
        %457 = vmatpush1.msra.mxu0 0.0
        %458 = vmatprep.subr.mxu0 0.0
        %459 = vmatpush1.msra.mxu0 0.0
        %460 = vmatprep.subr.mxu0 0.0
        %461 = vmatpush1.msra.mxu0 0.0
        %462 = vmatprep.subr.mxu0 0.0
        %463 = vmatpush1.msra.mxu0 0.0
        %464 = vmatprep.subr.mxu0 0.0
        %465 = vmatpush1.msra.mxu0 0.0
        %466 = vmatprep.subr.mxu0 0.0
        %467 = vmatpush1.msra.mxu0 0.0
        %468 = vmatprep.subr.mxu0 0.0
        %469 = vmatpush1.msra.mxu0 0.0
        %470 = vmatprep.subr.mxu0 0.0
        %471 = vmatpush1.msra.mxu0 0.0
        %472 = vmatprep.subr.mxu0 0.0
        %473 = vmatpush1.msra.mxu0 0.0
        %474 = vmatprep.subr.mxu0 0.0
        %475 = vmatpush1.msra.mxu0 0.0
        %476 = vmatprep.subr.mxu0 0.0
        %477 = vmatpush1.msra.mxu0 0.0
        %478 = vmatprep.subr.mxu0 0.0
        %479 = vmatpush1.msra.mxu0 0.0
        %480 = vmatprep.subr.mxu0 0.0
        %481 = vmatpush1.msra.mxu0 0.0
        %482 = vmatprep.subr.mxu0 0.0
        %483 = vmatpush1.msra.mxu0 0.0
        %484 = vmatprep.subr.mxu0 0.0
        %485 = vmatpush1.msra.mxu0 0.0
        %486 = vmatprep.subr.mxu0 0.0
        %487 = vmatpush1.msra.mxu0 0.0
        %488 = vmatprep.mubr.f32.mxu0 0.0
        %489 = vmatmul.mubr.f32.gmra.mrb[0].mxu0 %v400
        %v490 = vpop.f32.mrb[0].mxu0
        %v491 = vadd.f32 %v422, %v490
        %v492 = vpop.f32.mrb[0].mxu0
        %493 = vdwg.mxu0
        %v494 = vxor.u32 %v491, 2147483648
        %v495 = vmul.f32 %v494, 1.442695
        %v496 = vpow.pop %v495
        %v497 = vadd.f32 %v496, 1.0
        %v498 = vrcp.pop %v497
        %v499 = vmul.f32 1.0, %v498
        %v500 = vmul.f32 %v491, %v499
        %v501 = vld [vmem:[#allocation6] sm:$0xff]
        %v502 = vld [vmem:[#allocation6 + $0x8] sm:$0xff]
        %v503 = vld [vmem:[#allocation6 + $0x10] sm:$0xff]
        %v504 = vld [vmem:[#allocation6 + $0x18] sm:$0xff]
        %v505 = vld [vmem:[#allocation6 + $0x20] sm:$0xff]
        %v506 = vld [vmem:[#allocation6 + $0x28] sm:$0xff]
        %v507 = vld [vmem:[#allocation6 + $0x30] sm:$0xff]
        %v508 = vld [vmem:[#allocation6 + $0x38] sm:$0xff]
        %v509 = vld [vmem:[#allocation6 + $0x40] sm:$0xff]
        %v510 = vld [vmem:[#allocation6 + $0x48] sm:$0xff]
        %v511 = vld [vmem:[#allocation6 + $0x50] sm:$0xff]
        %v512 = vld [vmem:[#allocation6 + $0x58] sm:$0xff]
        %v513 = vld [vmem:[#allocation6 + $0x60] sm:$0xff]
        %v514 = vld [vmem:[#allocation6 + $0x68] sm:$0xff]
        %v515 = vld [vmem:[#allocation6 + $0x70] sm:$0xff]
        %v516 = vld [vmem:[#allocation6 + $0x78] sm:$0xff]
        %v517 = vld [vmem:[%s5] sm:$0x1]
        %v519 = vlaneseq
        %v520 = vshrl.u32 %v519, 7
        %v521 = vsub.s32 0, %v520
        %v522 = vrot.slane %v517, %v521
        %524 = vmatprep.subr.mxu0 0.0
        %525 = vmatpush1.msra.mxu0 %v501
        %526 = vmatprep.subr.mxu0 0.0
        %527 = vmatpush1.msra.mxu0 %v502
        %528 = vmatprep.subr.mxu0 0.0
        %529 = vmatpush1.msra.mxu0 %v503
        %530 = vmatprep.subr.mxu0 0.0
        %531 = vmatpush1.msra.mxu0 %v504
        %532 = vmatprep.subr.mxu0 0.0
        %533 = vmatpush1.msra.mxu0 %v505
        %534 = vmatprep.subr.mxu0 0.0
        %535 = vmatpush1.msra.mxu0 %v506
        %536 = vmatprep.subr.mxu0 0.0
        %537 = vmatpush1.msra.mxu0 %v507
        %538 = vmatprep.subr.mxu0 0.0
        %539 = vmatpush1.msra.mxu0 %v508
        %540 = vmatprep.subr.mxu0 0.0
        %541 = vmatpush1.msra.mxu0 %v509
        %542 = vmatprep.subr.mxu0 0.0
        %543 = vmatpush1.msra.mxu0 %v510
        %544 = vmatprep.subr.mxu0 0.0
        %545 = vmatpush1.msra.mxu0 %v511
        %546 = vmatprep.subr.mxu0 0.0
        %547 = vmatpush1.msra.mxu0 %v512
        %548 = vmatprep.subr.mxu0 0.0
        %549 = vmatpush1.msra.mxu0 %v513
        %550 = vmatprep.subr.mxu0 0.0
        %551 = vmatpush1.msra.mxu0 %v514
        %552 = vmatprep.subr.mxu0 0.0
        %553 = vmatpush1.msra.mxu0 %v515
        %554 = vmatprep.subr.mxu0 0.0
        %555 = vmatpush1.msra.mxu0 %v516
        %556 = vmatprep.subr.mxu0 0.0
        %557 = vmatpush1.msra.mxu0 0.0
        %558 = vmatprep.subr.mxu0 0.0
        %559 = vmatpush1.msra.mxu0 0.0
        %560 = vmatprep.subr.mxu0 0.0
        %561 = vmatpush1.msra.mxu0 0.0
        %562 = vmatprep.subr.mxu0 0.0
        %563 = vmatpush1.msra.mxu0 0.0
        %564 = vmatprep.subr.mxu0 0.0
        %565 = vmatpush1.msra.mxu0 0.0
        %566 = vmatprep.subr.mxu0 0.0
        %567 = vmatpush1.msra.mxu0 0.0
        %568 = vmatprep.subr.mxu0 0.0
        %569 = vmatpush1.msra.mxu0 0.0
        %570 = vmatprep.subr.mxu0 0.0
        %571 = vmatpush1.msra.mxu0 0.0
        %572 = vmatprep.subr.mxu0 0.0
        %573 = vmatpush1.msra.mxu0 0.0
        %574 = vmatprep.subr.mxu0 0.0
        %575 = vmatpush1.msra.mxu0 0.0
        %576 = vmatprep.subr.mxu0 0.0
        %577 = vmatpush1.msra.mxu0 0.0
        %578 = vmatprep.subr.mxu0 0.0
        %579 = vmatpush1.msra.mxu0 0.0
        %580 = vmatprep.subr.mxu0 0.0
        %581 = vmatpush1.msra.mxu0 0.0
        %582 = vmatprep.subr.mxu0 0.0
        %583 = vmatpush1.msra.mxu0 0.0
        %584 = vmatprep.subr.mxu0 0.0
        %585 = vmatpush1.msra.mxu0 0.0
        %586 = vmatprep.subr.mxu0 0.0
        %587 = vmatpush1.msra.mxu0 0.0
        %588 = vmatprep.mubr.f32.mxu0 0.0
        %589 = vmatmul.mubr.f32.gmra.mrb[0].mxu0 %v500
        %v590 = vpop.f32.mrb[0].mxu0
        %v591 = vadd.f32 %v522, %v590
        %v592 = vpop.f32.mrb[0].mxu0
        %593 = vdwg.mxu0
        %v594 = vxor.u32 %v591, 2147483648
        %v595 = vmul.f32 %v594, 1.442695
        %v596 = vpow.pop %v595
        %v597 = vadd.f32 %v596, 1.0
        %v598 = vrcp.pop %v597
        %v599 = vmul.f32 1.0, %v598
        %v600 = vmul.f32 %v591, %v599
        %v601 = vld [vmem:[%s6] sm:$0x1]
        %v603 = vlaneseq
        %v604 = vshrl.u32 %v603, 7
        %v605 = vsub.s32 0, %v604
        %v606 = vrot.slane %v601, %v605
        %v608 = vmul.f32 %v600, %v606
        %609 = vadd.xlane.f32.xlu0 %v608
        %v610 = vpop.xlane.xlu0 %609
        %s611 = sld [smem:[#allocation2]]
        %v612 = vstv %s611
        %v613 = vadd.f32 %v610, %v612
        %v614 = vld [vmem:[%s385] sm:$0xff]
        %615 = vset.pattern.permute.xlu0 0
        %616 = vperm.xlu0 %615, %v614
        %v617 = vpop.permute.xlu0 %616
        %vm618 = vcmp.eq.s32.totalorder %v395, %v617
        %v619 = vsel %vm618, %v613, 0.0
        %v620 = vrot.slane %v619, 4
        %v621 = vadd.f32 %v619, %v620
        %v622 = vrot.slane %v621, 2
        %v623 = vadd.f32 %v621, %v622
        %v624 = vrot.slane %v623, 1
        %v625 = vadd.f32 %v623, %v624
        %v626 = vadd.f32 %v625, 0.0
        %v627 = vld [vmem:[%s371] sm:$0x1]
        %v628 = vadd.f32 %v627, %v626
        %629 = vst [vmem:[%s371] sm:$0x1] %v628
        %s630 = sand.u32 %s231, 1
        %s631 = scalar_lea.sflag [#allocation5], %s630
        %s632 = sand.u32 %s231, 1
        %s633 = scalar_lea.vmem [#allocation8], %s632
        // Predicated region
        $region65: #{tpu_custom_call.1} parent=51 // pred_check
          %p634 = pneg %p241
        $region66: #{tpu_custom_call.1} parent=51 // pred_check_branch
          %636 = sbr.rel (%p634) target = $region68
        $region67: #{tpu_custom_call.1} parent=51 // pred_region
          %s638 = ssub.s32 16, 16
          %639 = vsyncadd %s631, %s638
          %s640 = smul.addr %s29, 16
          %s641 = scalar_lea.hbm %s8, %s640
          %s643 = sshll.u32 %s633, 4
          %s644 = int_to_ptr.vmem [resolvable:$true] %s643
          %646 = dma.vmem_to_hbm [thread:$0]  %s644, 16, %s641, %s631
        $region68: #{tpu_custom_call.1} parent=51 // pred_fallthru
          _
      $region52: #{tpu_custom_call.1} parent=5 // pred_fallthru
        _
      %p647 = scmp.le.s32.totalorder 2, %s20
      // Predicated region
      $region69: #{tpu_custom_call.1} parent=5 // pred_check
        %p648 = pneg %p647
      $region70: #{tpu_custom_call.1} parent=5 // pred_check_branch
        %650 = sbr.rel (%p648) target = $region72
      $region71: #{tpu_custom_call.1} parent=5 // pred_region
        %s651 = ssub.s32 %s20, 2
        // Predicated region
        $region73: #{tpu_custom_call.1} parent=71 // pred_check
          %p652 = pneg %p247
        $region74: #{tpu_custom_call.1} parent=71 // pred_check_branch
          %654 = sbr.rel (%p652) target = $region76
        $region75: #{tpu_custom_call.1} parent=71 // pred_region
          %s655 = sand.u32 %s232, 1
          %s656 = scalar_lea.sflag [#allocation5], %s655
          %s657 = sand.u32 %s232, 1
          %s658 = scalar_lea.vmem [#allocation8], %s657
          %659 = dma.done %s656, 16
        $region76: #{tpu_custom_call.1} parent=71 // pred_fallthru
          _
      $region72: #{tpu_custom_call.1} parent=5 // pred_fallthru
        _
    $region6: #{tpu_custom_call.1} parent=1 // loop_footer
      %s24 = sadd.s32 1, %s20
    $region7: #{tpu_custom_call.1} parent=1 // loop_footer_branch
      %19 = sbr.rel target = $region3
    $region8: #{tpu_custom_call.1} parent=1 // loop_exit
      _
    %660 = vsyncpa [#allocation4], 1
    %s661 = scalar_lea.sflag [#allocation4], 1
    %662 = vsyncpa %s661, 1
    %663 = vsyncpa [#allocation7], 1
    %664 = vsyncpa [#allocation5], 1
    %s665 = scalar_lea.sflag [#allocation5], 1
    %666 = vsyncpa %s665, 1

</llo_original>
